<compile_context>
chip_gen: v5e
topology: v5e:2x2
jax: 0.10.0
libtpu: 0.0.40
codegen_flags: <defaults>
</compile_context>

<pallas_src>
import jax
import jax.numpy as jnp
from jax.experimental import pallas as pl
from jax.experimental.pallas import tpu as pltpu


def _mlp_kernel(x_ref, w1_ref, b1_ref, w2_ref, b2_ref, w3_ref, b3_ref,
                w4_ref, b4_ref, o_ref):
    """One batch tile of the fused MLP, feature-major.

    x_ref: (inp, TM) bf16; w_i: torch-native (out_f, in_f) bf16;
    b_i: (out_f, 1) f32; o_ref: (out, TM) f32.
    """
    h = x_ref[...]                                                  # (inp, TM) bf16

    # Layer 1: W1 @ x + b1, ReLU  (MXU matmul f32-accumulate, VPU max)
    h = jnp.dot(w1_ref[...], h, preferred_element_type=jnp.float32) + b1_ref[...]
    h = jnp.maximum(h, 0.0).astype(jnp.bfloat16)                    # (H, TM)

    # Layer 2
    h = jnp.dot(w2_ref[...], h, preferred_element_type=jnp.float32) + b2_ref[...]
    h = jnp.maximum(h, 0.0).astype(jnp.bfloat16)

    # Layer 3
    h = jnp.dot(w3_ref[...], h, preferred_element_type=jnp.float32) + b3_ref[...]
    h = jnp.maximum(h, 0.0).astype(jnp.bfloat16)

    # Layer 4 + sigmoid.  Result is (out, TM): lane-dense, no masked stores.
    z = jnp.dot(w4_ref[...], h, preferred_element_type=jnp.float32) + b4_ref[...]
    # sigmoid = 1 / (1 + exp(-z)); exp and the approximate reciprocal both go to
    # the EUP slot (free wrt the VALU/MXU slots).
    o_ref[...] = pl.reciprocal(1.0 + jnp.exp(-z), approx=True)


def _round_up(a, b):
    return (a + b - 1) // b * b


def _const_spec(arr):
    # Full-array block with a constant index_map -> stays resident in VMEM
    # across all grid steps (fetched once).
    return pl.BlockSpec(arr.shape, lambda i: (0, 0))


def reg_discriminator_forward(x, params, *, tm=2048):
    """x: (N, inp) float32.

    params: torch-native layout — w_i: (out_features, in_features) float32,
    b_i: (out_features,) float32.
    Returns (N, out) float32, matching the PyTorch module's forward.
    """
    n, inp = x.shape
    h_dim = params["w1"].shape[0]
    out_dim = params["w4"].shape[0]

    # ---- tile-size selection ------------------------------------------------
    # TM sits in the lane dimension of every block, so it must be a multiple of
    # 128.  Big TM amortizes the per-grid-step overhead; VMEM is not binding
    # (<~3 MiB at TM=4096).  Keep >=2 grid steps when the batch allows it so
    # v7x's two TensorCores both get work on the "parallel" batch axis.
    n_pad = _round_up(n, 128)
    tm_eff = min(_round_up(max(tm, 128), 128), n_pad)
    if n_pad // tm_eff < 2 and n_pad >= 256:
        tm_eff = _round_up(n_pad // 2, 128)
    n_pad = _round_up(n_pad, tm_eff)
    num_tiles = n_pad // tm_eff

    # ---- operand prep (layout plumbing only) --------------------------------
    # Single fused cast(bf16) + transpose + pad pass over x (half the bytes of
    # padding the f32 array).  Padded columns are zeros and are sliced off
    # after the kernel, so they never feed anything that is kept.
    x_t = x.astype(jnp.bfloat16).T                       # (inp, N)
    if n_pad != n:
        x_t = jnp.pad(x_t, ((0, 0), (0, n_pad - n)))     # (inp, N_pad)

    wb = []
    for i in range(1, 5):
        wb.append(params[f"w{i}"].astype(jnp.bfloat16))                  # (out_f, in_f)
        wb.append(params[f"b{i}"].reshape(-1, 1).astype(jnp.float32))    # (out_f, 1)

    operands = (x_t, *wb)

    flops = 2 * n_pad * (inp * h_dim + 2 * h_dim * h_dim + h_dim * out_dim)
    bytes_accessed = (
        2 * n_pad * inp + 4 * n_pad * out_dim                      # x (bf16) in, y (f32) out
        + 2 * (inp * h_dim + 2 * h_dim * h_dim + h_dim * out_dim)  # bf16 weights (read once)
        + 4 * (3 * h_dim + out_dim)                                # f32 biases
    )

    y_t = pl.pallas_call(
        _mlp_kernel,
        out_shape=jax.ShapeDtypeStruct((out_dim, n_pad), jnp.float32),
        grid=(num_tiles,),
        in_specs=[pl.BlockSpec((inp, tm_eff), lambda i: (0, i))]   # streamed x tile
                 + [_const_spec(a) for a in wb],                    # resident weights/biases
        out_specs=pl.BlockSpec((out_dim, tm_eff), lambda i: (0, i)),
        compiler_params=pltpu.CompilerParams(
            dimension_semantics=("parallel",)),
        cost_estimate=pl.CostEstimate(
            flops=flops,
            transcendentals=2 * n_pad * out_dim,
            bytes_accessed=bytes_accessed),
    )(*operands)

    # Back to the module's (N, out) layout (cheap wrapper-side plumbing).
    return y_t[:, :n].T


def init_params(key, inp, n_hidden=64, out=1):
    """Deterministic init mimicking nn.Linear's U(-1/sqrt(fan_in), +1/sqrt(fan_in)),
    stored in torch-native layout: w (out_features, in_features), b (out_features,)."""
    dims = [(inp, n_hidden), (n_hidden, n_hidden), (n_hidden, n_hidden), (n_hidden, out)]
    params = {}
    for i, (fan_in, fan_out) in enumerate(dims, start=1):
        key, kw, kb = jax.random.split(key, 3)
        bound = 1.0 / jnp.sqrt(jnp.float32(fan_in))
        params[f"w{i}"] = jax.random.uniform(
            kw, (fan_out, fan_in), jnp.float32, minval=-bound, maxval=bound)
        params[f"b{i}"] = jax.random.uniform(
            kb, (fan_out,), jnp.float32, minval=-bound, maxval=bound)
    return params


def _reference_forward(x, params):
    """Pure-JAX f32 reference (matches the PyTorch module)."""
    h = jnp.maximum(x @ params["w1"].T + params["b1"], 0.0)
    h = jnp.maximum(h @ params["w2"].T + params["b2"], 0.0)
    h = jnp.maximum(h @ params["w3"].T + params["b3"], 0.0)
    z = h @ params["w4"].T + params["b4"]
    return jax.nn.sigmoid(z)


if __name__ == "__main__":
    key = jax.random.PRNGKey(0)
    k_x, k_x2, k_p = jax.random.split(key, 3)

    batch, inp, n_hidden, out = 8, 16, 64, 1
    params = init_params(k_p, inp, n_hidden=n_hidden, out=out)

    # Small case (single tile, padded tail sliced off).
    x = jax.random.normal(k_x, (batch, inp), jnp.float32)
    y = jax.block_until_ready(reg_discriminator_forward(x, params))
    y_ref = _reference_forward(x, params)
    assert y.shape == (batch, out)
    # bf16 matmul inputs with f32 accumulation -> relaxed tolerance on the sigmoid output.
    assert jnp.allclose(y, y_ref, atol=2e-2, rtol=0.0), "mismatch vs reference (small batch)"

    # Ragged / multi-tile case (exercises padding + >=2 grid steps).
    x2 = jax.random.normal(k_x2, (300, inp), jnp.float32)
    y2 = jax.block_until_ready(reg_discriminator_forward(x2, params))
    y2_ref = _reference_forward(x2, params)
    assert y2.shape == (300, out)
    assert jnp.allclose(y2, y2_ref, atol=2e-2, rtol=0.0), "mismatch vs reference (multi-tile)"

    print("KERNEL_OK")
</pallas_src>

<mosaic_0001>
module attributes {stable_mosaic.version = 11 : i64} {
  func.func @_mlp_kernel(%arg0: i32, %arg1: memref<16x128xbf16, #tpu.memory_space<vmem>>, %arg2: memref<64x16xbf16, #tpu.memory_space<vmem>>, %arg3: memref<64x1xf32, #tpu.memory_space<vmem>>, %arg4: memref<64x64xbf16, #tpu.memory_space<vmem>>, %arg5: memref<64x1xf32, #tpu.memory_space<vmem>>, %arg6: memref<64x64xbf16, #tpu.memory_space<vmem>>, %arg7: memref<64x1xf32, #tpu.memory_space<vmem>>, %arg8: memref<1x64xbf16, #tpu.memory_space<vmem>>, %arg9: memref<1x1xf32, #tpu.memory_space<vmem>>, %arg10: memref<1x128xf32, #tpu.memory_space<vmem>>) attributes {dimension_semantics = [#tpu.dimension_semantics<parallel>], iteration_bounds = array<i64: 1>, scalar_prefetch = 0 : i64, scratch_operands = 0 : i64, tpu.core_type = #tpu.core_type<tc>, window_params = [{transform_indices = @transform_0, window_bounds = array<i64: 16, 128>}, {pipeline_mode = #tpu.pipeline_mode<synchronous>, transform_indices = @transform_1, window_bounds = array<i64: 64, 16>}, {pipeline_mode = #tpu.pipeline_mode<synchronous>, transform_indices = @transform_2, window_bounds = array<i64: 64, 1>}, {pipeline_mode = #tpu.pipeline_mode<synchronous>, transform_indices = @transform_3, window_bounds = array<i64: 64, 64>}, {pipeline_mode = #tpu.pipeline_mode<synchronous>, transform_indices = @transform_4, window_bounds = array<i64: 64, 1>}, {pipeline_mode = #tpu.pipeline_mode<synchronous>, transform_indices = @transform_5, window_bounds = array<i64: 64, 64>}, {pipeline_mode = #tpu.pipeline_mode<synchronous>, transform_indices = @transform_6, window_bounds = array<i64: 64, 1>}, {pipeline_mode = #tpu.pipeline_mode<synchronous>, transform_indices = @transform_7, window_bounds = array<i64: 1, 64>}, {pipeline_mode = #tpu.pipeline_mode<synchronous>, transform_indices = @transform_8, window_bounds = array<i64: 1, 1>}, {transform_indices = @transform_9, window_bounds = array<i64: 1, 128>}]} {
    %c0 = arith.constant 0 : index
    %c0_0 = arith.constant 0 : index
    %0 = vector.load %arg1[%c0, %c0_0] : memref<16x128xbf16, #tpu.memory_space<vmem>>, vector<16x128xbf16>
    %c0_1 = arith.constant 0 : index
    %c0_2 = arith.constant 0 : index
    %1 = vector.load %arg2[%c0_1, %c0_2] : memref<64x16xbf16, #tpu.memory_space<vmem>>, vector<64x16xbf16>
    %cst = arith.constant dense<0.000000e+00> : vector<64x128xf32>
    %2 = tpu.matmul %1, %0, %cst {dimension_numbers = #tpu.dot_dimension_numbers<[1], [0], [0], [1], [0, 0, 1, 1], [], []>} : vector<64x16xbf16>, vector<16x128xbf16>, vector<64x128xf32> -> vector<64x128xf32>
    %c0_3 = arith.constant 0 : index
    %c0_4 = arith.constant 0 : index
    %3 = vector.load %arg3[%c0_3, %c0_4] : memref<64x1xf32, #tpu.memory_space<vmem>>, vector<64x1xf32>
    %4 = vector.broadcast %3 : vector<64x1xf32> to vector<64x128xf32>
    %5 = arith.addf %2, %4 : vector<64x128xf32>
    %cst_5 = arith.constant 0.000000e+00 : f32
    %6 = vector.broadcast %cst_5 : f32 to vector<64x128xf32>
    %7 = arith.maximumf %5, %6 : vector<64x128xf32>
    %8 = arith.truncf %7 : vector<64x128xf32> to vector<64x128xbf16>
    %c0_6 = arith.constant 0 : index
    %c0_7 = arith.constant 0 : index
    %9 = vector.load %arg4[%c0_6, %c0_7] : memref<64x64xbf16, #tpu.memory_space<vmem>>, vector<64x64xbf16>
    %cst_8 = arith.constant dense<0.000000e+00> : vector<64x128xf32>
    %10 = tpu.matmul %9, %8, %cst_8 {dimension_numbers = #tpu.dot_dimension_numbers<[1], [0], [0], [1], [0, 0, 1, 1], [], []>} : vector<64x64xbf16>, vector<64x128xbf16>, vector<64x128xf32> -> vector<64x128xf32>
    %c0_9 = arith.constant 0 : index
    %c0_10 = arith.constant 0 : index
    %11 = vector.load %arg5[%c0_9, %c0_10] : memref<64x1xf32, #tpu.memory_space<vmem>>, vector<64x1xf32>
    %12 = vector.broadcast %11 : vector<64x1xf32> to vector<64x128xf32>
    %13 = arith.addf %10, %12 : vector<64x128xf32>
    %cst_11 = arith.constant 0.000000e+00 : f32
    %14 = vector.broadcast %cst_11 : f32 to vector<64x128xf32>
    %15 = arith.maximumf %13, %14 : vector<64x128xf32>
    %16 = arith.truncf %15 : vector<64x128xf32> to vector<64x128xbf16>
    %c0_12 = arith.constant 0 : index
    %c0_13 = arith.constant 0 : index
    %17 = vector.load %arg6[%c0_12, %c0_13] : memref<64x64xbf16, #tpu.memory_space<vmem>>, vector<64x64xbf16>
    %cst_14 = arith.constant dense<0.000000e+00> : vector<64x128xf32>
    %18 = tpu.matmul %17, %16, %cst_14 {dimension_numbers = #tpu.dot_dimension_numbers<[1], [0], [0], [1], [0, 0, 1, 1], [], []>} : vector<64x64xbf16>, vector<64x128xbf16>, vector<64x128xf32> -> vector<64x128xf32>
    %c0_15 = arith.constant 0 : index
    %c0_16 = arith.constant 0 : index
    %19 = vector.load %arg7[%c0_15, %c0_16] : memref<64x1xf32, #tpu.memory_space<vmem>>, vector<64x1xf32>
    %20 = vector.broadcast %19 : vector<64x1xf32> to vector<64x128xf32>
    %21 = arith.addf %18, %20 : vector<64x128xf32>
    %cst_17 = arith.constant 0.000000e+00 : f32
    %22 = vector.broadcast %cst_17 : f32 to vector<64x128xf32>
    %23 = arith.maximumf %21, %22 : vector<64x128xf32>
    %24 = arith.truncf %23 : vector<64x128xf32> to vector<64x128xbf16>
    %c0_18 = arith.constant 0 : index
    %c0_19 = arith.constant 0 : index
    %25 = vector.load %arg8[%c0_18, %c0_19] : memref<1x64xbf16, #tpu.memory_space<vmem>>, vector<1x64xbf16>
    %cst_20 = arith.constant dense<0.000000e+00> : vector<1x128xf32>
    %26 = tpu.matmul %25, %24, %cst_20 {dimension_numbers = #tpu.dot_dimension_numbers<[1], [0], [0], [1], [0, 0, 1, 1], [], []>} : vector<1x64xbf16>, vector<64x128xbf16>, vector<1x128xf32> -> vector<1x128xf32>
    %c0_21 = arith.constant 0 : index
    %c0_22 = arith.constant 0 : index
    %27 = vector.load %arg9[%c0_21, %c0_22] : memref<1x1xf32, #tpu.memory_space<vmem>>, vector<1x1xf32>
    %28 = vector.broadcast %27 : vector<1x1xf32> to vector<1x128xf32>
    %29 = arith.addf %26, %28 : vector<1x128xf32>
    %cst_23 = arith.constant 0.000000e+00 : f32
    %30 = vector.broadcast %cst_23 : f32 to vector<1x128xf32>
    %31 = arith.subf %30, %29 : vector<1x128xf32>
    %32 = math.exp %31 : vector<1x128xf32>
    %cst_24 = arith.constant 1.000000e+00 : f32
    %33 = vector.broadcast %cst_24 : f32 to vector<1x128xf32>
    %34 = arith.addf %33, %32 : vector<1x128xf32>
    %35 = tpu.reciprocal %34 {approx = true} : vector<1x128xf32> -> vector<1x128xf32>
    %c0_25 = arith.constant 0 : index
    %c0_26 = arith.constant 0 : index
    %36 = vector.load %arg10[%c0_25, %c0_26] : memref<1x128xf32, #tpu.memory_space<vmem>>, vector<1x128xf32>
    tpu.vector_store %arg10[%c0_25, %c0_26], %35 {strides = array<i32>} : memref<1x128xf32, #tpu.memory_space<vmem>>, vector<1x128xf32>,
    return
  }
  func.func @transform_0(%arg0: i32) -> (i32, i32) {
    %c0_i32 = arith.constant 0 : i32
    %c0_i32_0 = arith.constant 0 : i32
    return %c0_i32, %arg0 : i32, i32
  }
  func.func @transform_1(%arg0: i32) -> (i32, i32) {
    %c0_i32 = arith.constant 0 : i32
    %c0_i32_0 = arith.constant 0 : i32
    %c0_i32_1 = arith.constant 0 : i32
    return %c0_i32, %c0_i32_0 : i32, i32
  }
  func.func @transform_2(%arg0: i32) -> (i32, i32) {
    %c0_i32 = arith.constant 0 : i32
    %c0_i32_0 = arith.constant 0 : i32
    %c0_i32_1 = arith.constant 0 : i32
    return %c0_i32, %c0_i32_0 : i32, i32
  }
  func.func @transform_3(%arg0: i32) -> (i32, i32) {
    %c0_i32 = arith.constant 0 : i32
    %c0_i32_0 = arith.constant 0 : i32
    %c0_i32_1 = arith.constant 0 : i32
    return %c0_i32, %c0_i32_0 : i32, i32
  }
  func.func @transform_4(%arg0: i32) -> (i32, i32) {
    %c0_i32 = arith.constant 0 : i32
    %c0_i32_0 = arith.constant 0 : i32
    %c0_i32_1 = arith.constant 0 : i32
    return %c0_i32, %c0_i32_0 : i32, i32
  }
  func.func @transform_5(%arg0: i32) -> (i32, i32) {
    %c0_i32 = arith.constant 0 : i32
    %c0_i32_0 = arith.constant 0 : i32
    %c0_i32_1 = arith.constant 0 : i32
    return %c0_i32, %c0_i32_0 : i32, i32
  }
  func.func @transform_6(%arg0: i32) -> (i32, i32) {
    %c0_i32 = arith.constant 0 : i32
    %c0_i32_0 = arith.constant 0 : i32
    %c0_i32_1 = arith.constant 0 : i32
    return %c0_i32, %c0_i32_0 : i32, i32
  }
  func.func @transform_7(%arg0: i32) -> (i32, i32) {
    %c0_i32 = arith.constant 0 : i32
    %c0_i32_0 = arith.constant 0 : i32
    %c0_i32_1 = arith.constant 0 : i32
    return %c0_i32, %c0_i32_0 : i32, i32
  }
  func.func @transform_8(%arg0: i32) -> (i32, i32) {
    %c0_i32 = arith.constant 0 : i32
    %c0_i32_0 = arith.constant 0 : i32
    %c0_i32_1 = arith.constant 0 : i32
    return %c0_i32, %c0_i32_0 : i32, i32
  }
  func.func @transform_9(%arg0: i32) -> (i32, i32) {
    %c0_i32 = arith.constant 0 : i32
    %c0_i32_0 = arith.constant 0 : i32
    return %c0_i32, %arg0 : i32, i32
  }
}

</mosaic_0001>

<llo_original>
// kernel: tpu_custom_call.1
$region0: #{tpu_custom_call.1}
  #allocation0 [shape = 'u32[]', space=smem, size = 0x4, offset = 0x4, fixed_abs, tag = 'smem constant byte address 0x4 - core index']
  #allocation1 [shape = 'u32[72,128]{1,0:T(1,128)}', space=vmem, size = 0x9000, scoped, tag = 'internal scratch']
  #allocation2 [shape = 'f32[1,1]{1,0:T(1,128)S(1)}', space=vmem, size = 0x200, scoped, tag = 'scoped memory for tpu_custom_call.1']
  %s0 = inlined_call_operand.vmem [shape: bf16[16,128], index: 0, kind: input, shape index: {}]
  %s1 = inlined_call_operand.vmem [shape: bf16[64,16], index: 1, kind: input, shape index: {}]
  %s2 = inlined_call_operand.vmem [shape: f32[64,1], index: 2, kind: input, shape index: {}]
  %s3 = inlined_call_operand.vmem [shape: bf16[64,64], index: 3, kind: input, shape index: {}]
  %s4 = inlined_call_operand.vmem [shape: f32[64,1], index: 4, kind: input, shape index: {}]
  %s5 = inlined_call_operand.vmem [shape: bf16[64,64], index: 5, kind: input, shape index: {}]
  %s6 = inlined_call_operand.vmem [shape: f32[64,1], index: 6, kind: input, shape index: {}]
  %s7 = inlined_call_operand.vmem [shape: bf16[1,64], index: 7, kind: input, shape index: {}]
  %s8 = inlined_call_operand.<no memory space> [shape: f32[1,1], index: 8, kind: input, shape index: {}]
  %s9 = inlined_call_operand.hbm [shape: f32[1,128], index: 9, kind: output, shape index: {}]
  %s10 = sld [smem:[#allocation0]]
  $region46: #{tpu_custom_call.1} parent=0
    _
  %s12 = ssub.s32 1, %s10
  %s13 = scalar_select 0, %s12, %s10
  %v14 = vstv %s8
  %15 = vst [vmem:[#allocation2] sm:$0x1] %v14
  $region1: #{tpu_custom_call.1} parent=0
    #allocation3 [shape = 'u8[512]{0}', space=vmem, size = 0x400, scoped, tag = 'output window, operand 0, single buffered']
    #allocation4 [shape = 's32[1]{0}', space=sflag, size = 0x4, scoped, tag = 'scoped memory for tpu_custom_call.1']
    %16 = vsyncpa [#allocation4], 0
    // Predicated region
    $region2: #{tpu_custom_call.1} parent=1 // pred_check
      _
    $region3: #{tpu_custom_call.1} parent=1 // pred_check_branch
      %18 = sbr.rel (0) target = $region5
    $region4: #{tpu_custom_call.1} parent=1 // pred_region
      _
    $region5: #{tpu_custom_call.1} parent=1 // pred_fallthru
      _
    // Predicated region
    $region6: #{tpu_custom_call.1} parent=1 // pred_check
      _
    $region7: #{tpu_custom_call.1} parent=1 // pred_check_branch
      %20 = sbr.rel (0) target = $region9
    $region8: #{tpu_custom_call.1} parent=1 // pred_region
      _
    $region9: #{tpu_custom_call.1} parent=1 // pred_fallthru
      _
    // Predicated region
    $region10: #{tpu_custom_call.1} parent=1 // pred_check
      _
    $region11: #{tpu_custom_call.1} parent=1 // pred_check_branch
      %22 = sbr.rel (0) target = $region13
    $region12: #{tpu_custom_call.1} parent=1 // pred_region
      _
    $region13: #{tpu_custom_call.1} parent=1 // pred_fallthru
      _
    // Predicated region
    $region14: #{tpu_custom_call.1} parent=1 // pred_check
      _
    $region15: #{tpu_custom_call.1} parent=1 // pred_check_branch
      %24 = sbr.rel (0) target = $region17
    $region16: #{tpu_custom_call.1} parent=1 // pred_region
      _
    $region17: #{tpu_custom_call.1} parent=1 // pred_fallthru
      _
    // Predicated region
    $region18: #{tpu_custom_call.1} parent=1 // pred_check
      _
    $region19: #{tpu_custom_call.1} parent=1 // pred_check_branch
      %26 = sbr.rel (0) target = $region21
    $region20: #{tpu_custom_call.1} parent=1 // pred_region
      _
    $region21: #{tpu_custom_call.1} parent=1 // pred_fallthru
      _
    // Predicated region
    $region22: #{tpu_custom_call.1} parent=1 // pred_check
      _
    $region23: #{tpu_custom_call.1} parent=1 // pred_check_branch
      %28 = sbr.rel (0) target = $region25
    $region24: #{tpu_custom_call.1} parent=1 // pred_region
      _
    $region25: #{tpu_custom_call.1} parent=1 // pred_fallthru
      _
    // Predicated region
    $region26: #{tpu_custom_call.1} parent=1 // pred_check
      _
    $region27: #{tpu_custom_call.1} parent=1 // pred_check_branch
      %30 = sbr.rel (0) target = $region29
    $region28: #{tpu_custom_call.1} parent=1 // pred_region
      _
    $region29: #{tpu_custom_call.1} parent=1 // pred_fallthru
      _
    // Predicated region
    $region30: #{tpu_custom_call.1} parent=1 // pred_check
      _
    $region31: #{tpu_custom_call.1} parent=1 // pred_check_branch
      %32 = sbr.rel (0) target = $region33
    $region32: #{tpu_custom_call.1} parent=1 // pred_region
      _
    $region33: #{tpu_custom_call.1} parent=1 // pred_fallthru
      _
    // Predicated region
    $region34: #{tpu_custom_call.1} parent=1 // pred_check
      _
    $region35: #{tpu_custom_call.1} parent=1 // pred_check_branch
      %34 = sbr.rel (0) target = $region37
    $region36: #{tpu_custom_call.1} parent=1 // pred_region
      _
    $region37: #{tpu_custom_call.1} parent=1 // pred_fallthru
      _
    %v36 = vld [vmem:[%s0] sm:$0xf]
    %v37 = vld [vmem:[%s0 + $0x4] sm:$0xf]
    %v38 = vld [vmem:[%s1] sm:$0xf]
    %v39 = vld [vmem:[%s1 + $0x4] sm:$0xf]
    %v40 = vld [vmem:[%s1 + $0x8] sm:$0xf]
    %v41 = vld [vmem:[%s1 + $0xc] sm:$0xf]
    %v42 = vld [vmem:[%s1 + $0x10] sm:$0xf]
    %v43 = vld [vmem:[%s1 + $0x14] sm:$0xf]
    %v44 = vld [vmem:[%s1 + $0x18] sm:$0xf]
    %v45 = vld [vmem:[%s1 + $0x1c] sm:$0xf]
    %v46 = vld [vmem:[%s2] sm:$0xff]
    %v47 = vld [vmem:[%s2 + $0x8] sm:$0xff]
    %v48 = vld [vmem:[%s2 + $0x10] sm:$0xff]
    %v49 = vld [vmem:[%s2 + $0x18] sm:$0xff]
    %v50 = vld [vmem:[%s2 + $0x20] sm:$0xff]
    %v51 = vld [vmem:[%s2 + $0x28] sm:$0xff]
    %v52 = vld [vmem:[%s2 + $0x30] sm:$0xff]
    %v53 = vld [vmem:[%s2 + $0x38] sm:$0xff]
    %55 = vset.pattern.permute.xlu0 0
    %56 = vperm.xlu0 %55, %v46
    %v57 = vpop.permute.xlu0 %56
    %60 = vset.pattern.permute.xlu0 0
    %61 = vperm.xlu0 %60, %v47
    %v62 = vpop.permute.xlu0 %61
    %65 = vset.pattern.permute.xlu0 0
    %66 = vperm.xlu0 %65, %v48
    %v67 = vpop.permute.xlu0 %66
    %70 = vset.pattern.permute.xlu0 0
    %71 = vperm.xlu0 %70, %v49
    %v72 = vpop.permute.xlu0 %71
    %75 = vset.pattern.permute.xlu0 0
    %76 = vperm.xlu0 %75, %v50
    %v77 = vpop.permute.xlu0 %76
    %80 = vset.pattern.permute.xlu0 0
    %81 = vperm.xlu0 %80, %v51
    %v82 = vpop.permute.xlu0 %81
    %85 = vset.pattern.permute.xlu0 0
    %86 = vperm.xlu0 %85, %v52
    %v87 = vpop.permute.xlu0 %86
    %90 = vset.pattern.permute.xlu0 0
    %91 = vperm.xlu0 %90, %v53
    %v92 = vpop.permute.xlu0 %91
    %v102 = vunpack.c.l.b16 %v38
    %v103 = vunpack.c.l.b16 %v39
    %v104 = vunpack.c.l.b16 %v40
    %v105 = vunpack.c.l.b16 %v41
    %v106 = vunpack.c.l.b16 %v42
    %v107 = vunpack.c.l.b16 %v43
    %v108 = vunpack.c.l.b16 %v44
    %v109 = vunpack.c.l.b16 %v45
    %v110 = vpack.c.b16 %v103, %v102
    %v111 = vpack.c.b16 %v105, %v104
    %v112 = vpack.c.b16 %v107, %v106
    %v113 = vpack.c.b16 %v109, %v108
    %v116 = vunpack.c.l.b16 %v36
    %v117 = vunpack.c.l.b16 %v37
    %v118 = vpack.c.b16 %v117, %v116
    %vm120 = vcmask 130048
    %v122 = vsel %vm120, %v110, 0
    %v125 = vsel %vm120, %v111, 0
    %v128 = vsel %vm120, %v112, 0
    %v131 = vsel %vm120, %v113, 0
    %133 = vmatpush.bf16.msra.mxu0 0
    %134 = vmatpush.bf16.msra.mxu0 0
    %135 = vmatpush.bf16.msra.mxu0 0
    %136 = vmatpush.bf16.msra.mxu0 0
    %137 = vmatpush.bf16.msra.mxu0 0
    %138 = vmatpush.bf16.msra.mxu0 0
    %139 = vmatpush.bf16.msra.mxu0 0
    %140 = vmatpush.bf16.msra.mxu0 %v118
    %141 = vmatmul.bf16.gmra.mxu0 %v122
    %v142 = vpop.f32.mrf.mxu0
    %v143 = vadd.f32 %v57, %v142
    %v144 = vpop.f32.mrf.mxu0
    %v145 = vadd.f32 %v62, %v144
    %146 = vmatmul.bf16.gmra.mxu0 %v125
    %v147 = vpop.f32.mrf.mxu0
    %v148 = vadd.f32 %v67, %v147
    %v149 = vpop.f32.mrf.mxu0
    %v150 = vadd.f32 %v72, %v149
    %151 = vmatmul.bf16.gmra.mxu0 %v128
    %v152 = vpop.f32.mrf.mxu0
    %v153 = vadd.f32 %v77, %v152
    %v154 = vpop.f32.mrf.mxu0
    %v155 = vadd.f32 %v82, %v154
    %156 = vmatmul.bf16.gmra.mxu0 %v131
    %v157 = vpop.f32.mrf.mxu0
    %v158 = vadd.f32 %v87, %v157
    %v159 = vpop.f32.mrf.mxu0
    %v160 = vadd.f32 %v92, %v159
    %161 = vdwg.mxu0
    %v162 = vmax.f32 %v143, 0.0
    %v163 = vmax.f32 %v145, 0.0
    %v164 = vmax.f32 %v148, 0.0
    %v165 = vmax.f32 %v150, 0.0
    %v166 = vmax.f32 %v153, 0.0
    %v167 = vmax.f32 %v155, 0.0
    %v168 = vmax.f32 %v158, 0.0
    %v169 = vmax.f32 %v160, 0.0
    %v170 = vpack.c.bf16 %v163, %v162
    %v171 = vpack.c.bf16 %v165, %v164
    %v172 = vpack.c.bf16 %v167, %v166
    %v173 = vpack.c.bf16 %v169, %v168
    %v174 = vld [vmem:[%s3] sm:$0xf]
    %v175 = vld [vmem:[%s3 + $0x4] sm:$0xf]
    %v176 = vld [vmem:[%s3 + $0x8] sm:$0xf]
    %v177 = vld [vmem:[%s3 + $0xc] sm:$0xf]
    %v178 = vld [vmem:[%s3 + $0x10] sm:$0xf]
    %v179 = vld [vmem:[%s3 + $0x14] sm:$0xf]
    %v180 = vld [vmem:[%s3 + $0x18] sm:$0xf]
    %v181 = vld [vmem:[%s3 + $0x1c] sm:$0xf]
    %v182 = vld [vmem:[%s4] sm:$0xff]
    %v183 = vld [vmem:[%s4 + $0x8] sm:$0xff]
    %v184 = vld [vmem:[%s4 + $0x10] sm:$0xff]
    %v185 = vld [vmem:[%s4 + $0x18] sm:$0xff]
    %v186 = vld [vmem:[%s4 + $0x20] sm:$0xff]
    %v187 = vld [vmem:[%s4 + $0x28] sm:$0xff]
    %v188 = vld [vmem:[%s4 + $0x30] sm:$0xff]
    %v189 = vld [vmem:[%s4 + $0x38] sm:$0xff]
    %191 = vset.pattern.permute.xlu0 0
    %192 = vperm.xlu0 %191, %v182
    %v193 = vpop.permute.xlu0 %192
    %196 = vset.pattern.permute.xlu0 0
    %197 = vperm.xlu0 %196, %v183
    %v198 = vpop.permute.xlu0 %197
    %201 = vset.pattern.permute.xlu0 0
    %202 = vperm.xlu0 %201, %v184
    %v203 = vpop.permute.xlu0 %202
    %206 = vset.pattern.permute.xlu0 0
    %207 = vperm.xlu0 %206, %v185
    %v208 = vpop.permute.xlu0 %207
    %211 = vset.pattern.permute.xlu0 0
    %212 = vperm.xlu0 %211, %v186
    %v213 = vpop.permute.xlu0 %212
    %216 = vset.pattern.permute.xlu0 0
    %217 = vperm.xlu0 %216, %v187
    %v218 = vpop.permute.xlu0 %217
    %221 = vset.pattern.permute.xlu0 0
    %222 = vperm.xlu0 %221, %v188
    %v223 = vpop.permute.xlu0 %222
    %226 = vset.pattern.permute.xlu0 0
    %227 = vperm.xlu0 %226, %v189
    %v228 = vpop.permute.xlu0 %227
    %v238 = vunpack.c.l.b16 %v174
    %v239 = vunpack.c.l.b16 %v175
    %v240 = vunpack.c.l.b16 %v176
    %v241 = vunpack.c.l.b16 %v177
    %v242 = vunpack.c.l.b16 %v178
    %v243 = vunpack.c.l.b16 %v179
    %v244 = vunpack.c.l.b16 %v180
    %v245 = vunpack.c.l.b16 %v181
    %v246 = vpack.c.b16 %v239, %v238
    %v247 = vpack.c.b16 %v241, %v240
    %v248 = vpack.c.b16 %v243, %v242
    %v249 = vpack.c.b16 %v245, %v244
    %vm250 = vcmask 523264
    %v252 = vsel %vm250, %v246, 0
    %v255 = vsel %vm250, %v247, 0
    %v258 = vsel %vm250, %v248, 0
    %v261 = vsel %vm250, %v249, 0
    %263 = vmatpush.bf16.msra.mxu0 0
    %264 = vmatpush.bf16.msra.mxu0 0
    %265 = vmatpush.bf16.msra.mxu0 0
    %266 = vmatpush.bf16.msra.mxu0 0
    %267 = vmatpush.bf16.msra.mxu0 %v173
    %268 = vmatpush.bf16.msra.mxu0 %v172
    %269 = vmatpush.bf16.msra.mxu0 %v171
    %270 = vmatpush.bf16.msra.mxu0 %v170
    %271 = vmatmul.bf16.gmra.mxu0 %v252
    %v272 = vpop.f32.mrf.mxu0
    %v273 = vadd.f32 %v193, %v272
    %v274 = vpop.f32.mrf.mxu0
    %v275 = vadd.f32 %v198, %v274
    %276 = vmatmul.bf16.gmra.mxu0 %v255
    %v277 = vpop.f32.mrf.mxu0
    %v278 = vadd.f32 %v203, %v277
    %v279 = vpop.f32.mrf.mxu0
    %v280 = vadd.f32 %v208, %v279
    %281 = vmatmul.bf16.gmra.mxu0 %v258
    %v282 = vpop.f32.mrf.mxu0
    %v283 = vadd.f32 %v213, %v282
    %v284 = vpop.f32.mrf.mxu0
    %v285 = vadd.f32 %v218, %v284
    %286 = vmatmul.bf16.gmra.mxu0 %v261
    %v287 = vpop.f32.mrf.mxu0
    %v288 = vadd.f32 %v223, %v287
    %v289 = vpop.f32.mrf.mxu0
    %v290 = vadd.f32 %v228, %v289
    %291 = vdwg.mxu0
    %v292 = vmax.f32 %v273, 0.0
    %v293 = vmax.f32 %v275, 0.0
    %v294 = vmax.f32 %v278, 0.0
    %v295 = vmax.f32 %v280, 0.0
    %v296 = vmax.f32 %v283, 0.0
    %v297 = vmax.f32 %v285, 0.0
    %v298 = vmax.f32 %v288, 0.0
    %v299 = vmax.f32 %v290, 0.0
    %v300 = vpack.c.bf16 %v293, %v292
    %v301 = vpack.c.bf16 %v295, %v294
    %v302 = vpack.c.bf16 %v297, %v296
    %v303 = vpack.c.bf16 %v299, %v298
    %v304 = vld [vmem:[%s5] sm:$0xf]
    %v305 = vld [vmem:[%s5 + $0x4] sm:$0xf]
    %v306 = vld [vmem:[%s5 + $0x8] sm:$0xf]
    %v307 = vld [vmem:[%s5 + $0xc] sm:$0xf]
    %v308 = vld [vmem:[%s5 + $0x10] sm:$0xf]
    %v309 = vld [vmem:[%s5 + $0x14] sm:$0xf]
    %v310 = vld [vmem:[%s5 + $0x18] sm:$0xf]
    %v311 = vld [vmem:[%s5 + $0x1c] sm:$0xf]
    %v312 = vld [vmem:[%s6] sm:$0xff]
    %v313 = vld [vmem:[%s6 + $0x8] sm:$0xff]
    %v314 = vld [vmem:[%s6 + $0x10] sm:$0xff]
    %v315 = vld [vmem:[%s6 + $0x18] sm:$0xff]
    %v316 = vld [vmem:[%s6 + $0x20] sm:$0xff]
    %v317 = vld [vmem:[%s6 + $0x28] sm:$0xff]
    %v318 = vld [vmem:[%s6 + $0x30] sm:$0xff]
    %v319 = vld [vmem:[%s6 + $0x38] sm:$0xff]
    %321 = vset.pattern.permute.xlu0 0
    %322 = vperm.xlu0 %321, %v312
    %v323 = vpop.permute.xlu0 %322
    %326 = vset.pattern.permute.xlu0 0
    %327 = vperm.xlu0 %326, %v313
    %v328 = vpop.permute.xlu0 %327
    %331 = vset.pattern.permute.xlu0 0
    %332 = vperm.xlu0 %331, %v314
    %v333 = vpop.permute.xlu0 %332
    %336 = vset.pattern.permute.xlu0 0
    %337 = vperm.xlu0 %336, %v315
    %v338 = vpop.permute.xlu0 %337
    %341 = vset.pattern.permute.xlu0 0
    %342 = vperm.xlu0 %341, %v316
    %v343 = vpop.permute.xlu0 %342
    %346 = vset.pattern.permute.xlu0 0
    %347 = vperm.xlu0 %346, %v317
    %v348 = vpop.permute.xlu0 %347
    %351 = vset.pattern.permute.xlu0 0
    %352 = vperm.xlu0 %351, %v318
    %v353 = vpop.permute.xlu0 %352
    %356 = vset.pattern.permute.xlu0 0
    %357 = vperm.xlu0 %356, %v319
    %v358 = vpop.permute.xlu0 %357
    %v368 = vunpack.c.l.b16 %v304
    %v369 = vunpack.c.l.b16 %v305
    %v370 = vunpack.c.l.b16 %v306
    %v371 = vunpack.c.l.b16 %v307
    %v372 = vunpack.c.l.b16 %v308
    %v373 = vunpack.c.l.b16 %v309
    %v374 = vunpack.c.l.b16 %v310
    %v375 = vunpack.c.l.b16 %v311
    %v376 = vpack.c.b16 %v369, %v368
    %v377 = vpack.c.b16 %v371, %v370
    %v378 = vpack.c.b16 %v373, %v372
    %v379 = vpack.c.b16 %v375, %v374
    %v381 = vsel %vm250, %v376, 0
    %v384 = vsel %vm250, %v377, 0
    %v387 = vsel %vm250, %v378, 0
    %v390 = vsel %vm250, %v379, 0
    %392 = vmatpush.bf16.msra.mxu0 0
    %393 = vmatpush.bf16.msra.mxu0 0
    %394 = vmatpush.bf16.msra.mxu0 0
    %395 = vmatpush.bf16.msra.mxu0 0
    %396 = vmatpush.bf16.msra.mxu0 %v303
    %397 = vmatpush.bf16.msra.mxu0 %v302
    %398 = vmatpush.bf16.msra.mxu0 %v301
    %399 = vmatpush.bf16.msra.mxu0 %v300
    %400 = vmatmul.bf16.gmra.mxu0 %v381
    %v401 = vpop.f32.mrf.mxu0
    %v402 = vadd.f32 %v323, %v401
    %v403 = vpop.f32.mrf.mxu0
    %v404 = vadd.f32 %v328, %v403
    %405 = vmatmul.bf16.gmra.mxu0 %v384
    %v406 = vpop.f32.mrf.mxu0
    %v407 = vadd.f32 %v333, %v406
    %v408 = vpop.f32.mrf.mxu0
    %v409 = vadd.f32 %v338, %v408
    %410 = vmatmul.bf16.gmra.mxu0 %v387
    %v411 = vpop.f32.mrf.mxu0
    %v412 = vadd.f32 %v343, %v411
    %v413 = vpop.f32.mrf.mxu0
    %v414 = vadd.f32 %v348, %v413
    %415 = vmatmul.bf16.gmra.mxu0 %v390
    %v416 = vpop.f32.mrf.mxu0
    %v417 = vadd.f32 %v353, %v416
    %v418 = vpop.f32.mrf.mxu0
    %v419 = vadd.f32 %v358, %v418
    %420 = vdwg.mxu0
    %v421 = vmax.f32 %v402, 0.0
    %v422 = vmax.f32 %v404, 0.0
    %v423 = vmax.f32 %v407, 0.0
    %v424 = vmax.f32 %v409, 0.0
    %v425 = vmax.f32 %v412, 0.0
    %v426 = vmax.f32 %v414, 0.0
    %v427 = vmax.f32 %v417, 0.0
    %v428 = vmax.f32 %v419, 0.0
    %v429 = vpack.c.bf16 %v422, %v421
    %v430 = vpack.c.bf16 %v424, %v423
    %v431 = vpack.c.bf16 %v426, %v425
    %v432 = vpack.c.bf16 %v428, %v427
    %v433 = vld [vmem:[%s7] sm:$0x1]
    %v434 = vld [vmem:[#allocation2] sm:$0x1]
    %436 = vset.pattern.permute.xlu0 0
    %437 = vperm.xlu0 %436, %v434
    %v438 = vpop.permute.xlu0 %437
    %v440 = vperm.slane %v438, 0
    %v442 = vsel %vm250, %v433, 0
    %444 = vmatpush.bf16.msra.mxu0 0
    %445 = vmatpush.bf16.msra.mxu0 0
    %446 = vmatpush.bf16.msra.mxu0 0
    %447 = vmatpush.bf16.msra.mxu0 0
    %448 = vmatpush.bf16.msra.mxu0 %v432
    %449 = vmatpush.bf16.msra.mxu0 %v431
    %450 = vmatpush.bf16.msra.mxu0 %v430
    %451 = vmatpush.bf16.msra.mxu0 %v429
    %452 = vmatmul.bf16.gmra.mxu0 %v442
    %v453 = vpop.f32.mrf.mxu0
    %v454 = vadd.f32 %v440, %v453
    %v455 = vpop.f32.mrf.mxu0
    %456 = vdwg.mxu0
    %v457 = vsub.f32 0.0, %v454
    %v458 = vmul.f32 %v457, 1.442695
    %v459 = vpow.pop %v458
    %v460 = vadd.f32 %v459, 1.0
    %v461 = vrcp.pop %v460
    %462 = vst [vmem:[#allocation3] sm:$0x1] %v461
    // Predicated region
    $region38: #{tpu_custom_call.1} parent=1 // pred_check
      _
    $region39: #{tpu_custom_call.1} parent=1 // pred_check_branch
      %464 = sbr.rel (0) target = $region41
    $region40: #{tpu_custom_call.1} parent=1 // pred_region
      %466 = vsyncadd [#allocation4], 0
      %s468 = sshll.u32 [#allocation3], 4
      %s469 = int_to_ptr.vmem [resolvable:$true] %s468
      %s470 = sshll.u32 %s9, 4
      %s471 = int_to_ptr.hbm [resolvable:$true] %s470
      %473 = dma.vmem_to_hbm [thread:$0]  %s469, 16, %s471, [#allocation4]
    $region41: #{tpu_custom_call.1} parent=1 // pred_fallthru
      _
    // Predicated region
    $region42: #{tpu_custom_call.1} parent=1 // pred_check
      _
    $region43: #{tpu_custom_call.1} parent=1 // pred_check_branch
      %475 = sbr.rel (0) target = $region45
    $region44: #{tpu_custom_call.1} parent=1 // pred_region
      %477 = dma.done [#allocation4], 16
    $region45: #{tpu_custom_call.1} parent=1 // pred_fallthru
      _
    %478 = vsyncpa [#allocation4], 1

</llo_original>
